<compile_context>
chip_gen: v7x
topology: tpu7x:2x2x1
jax: 0.10.0
libtpu: 0.0.40
codegen_flags: <defaults>
</compile_context>

<pallas_src>
import jax
import jax.numpy as jnp
from jax.experimental import pallas as pl
from jax.experimental.pallas import tpu as pltpu


def _round_up(x: int, m: int) -> int:
    return ((x + m - 1) // m) * m


def _linear_kernel(x_ref, w_ref, b_ref, o_ref):
    # x_ref: (TB, F) native dtype, w_ref: (F, C) bf16, b_ref: (1, C) f32,
    # o_ref: (TB, C) f32.
    x = x_ref[...].astype(jnp.bfloat16)  # in-kernel cast rides the VPU slot
    acc = jnp.dot(x, w_ref[...], preferred_element_type=jnp.float32)
    o_ref[...] = (acc + b_ref[...]).astype(o_ref.dtype)


_TB_MAX = 2048                      # rows per grid step, upper cap
_SMALL_BYPASS_BYTES = 256 * 1024    # whole x below this -> plain fused XLA matmul


def _vmem_budget():
    """(total resident VMEM budget, scoped vmem_limit_bytes to request)."""
    try:
        cap = int(pltpu.get_tpu_info().vmem_capacity_bytes)
    except Exception:
        cap = 64 * 1024 * 1024      # v7x per-TC VMEM; most conservative fallback
    budget = cap // 2
    limit = min((cap * 3) // 4, 100 * 1024 * 1024)
    return budget, limit


def _pick_tb(B, F, C, x_itemsize, budget_bytes):
    """Batch tile: biggest layout-aware tile that fits the VMEM budget."""
    f_pad = _round_up(F, 128)
    c_pad = _round_up(C, 128)
    # Per batch-row bytes: double-buffered input tile + double-buffered output tile.
    per_row = 2 * f_pad * x_itemsize + 2 * c_pad * 4
    # Grid-invariant weight (bf16) + bias (f32); allocated double-buffered by default.
    fixed = 2 * (_round_up(F, 16) * c_pad * 2) + 2 * (8 * c_pad * 4)
    rows = (budget_bytes - fixed) // max(per_row, 1)
    tb = max(16, min(_TB_MAX, (rows // 16) * 16, _round_up(B, 16)))
    # v7x megacore: make sure both TensorCores get at least one grid step.
    while B > 16 and tb > 16 and pl.cdiv(B, tb) < 2:
        tb = max(16, _round_up(tb // 2, 16))
    return tb


def expression_classifier_forward(x, weight, bias, *, tb=None, use_pallas=None):
    """Equivalent of nn.Linear(feature_dim, num_classes)(x).

    x:      [batch, feature_dim]
    weight: [num_classes, feature_dim]   (PyTorch convention)
    bias:   [num_classes]
    returns [batch, num_classes] float32
    """
    B, F = x.shape
    C = weight.shape[0]
    x_itemsize = jnp.dtype(x.dtype).itemsize
    x_bytes = B * F * x_itemsize

    # Weight/bias are tiny: one-time transpose + bf16 cast outside the kernel.
    w_t = weight.T.astype(jnp.bfloat16)            # [F, C]
    b2d = bias.reshape(1, C).astype(jnp.float32)   # broadcast over rows in-kernel

    if use_pallas is None:
        use_pallas = x_bytes > _SMALL_BYPASS_BYTES
    if not use_pallas:
        # Tiny problems: let XLA fuse the matmul into the surrounding graph.
        out = jnp.dot(x.astype(jnp.bfloat16), w_t,
                      preferred_element_type=jnp.float32) + b2d
        return out.astype(jnp.float32)

    budget, vmem_limit = _vmem_budget()
    if tb is None:
        tb = _pick_tb(B, F, C, x_itemsize, budget)
    else:
        tb = max(16, _round_up(int(tb), 16))

    grid = (pl.cdiv(B, tb),)   # partial last block handled by Pallas (no host-side pad)

    cost = pl.CostEstimate(
        flops=2 * B * F * C,
        transcendentals=0,
        bytes_accessed=x_bytes + F * C * 2 + C * 4 + B * C * 4,
    )

    return pl.pallas_call(
        _linear_kernel,
        out_shape=jax.ShapeDtypeStruct((B, C), jnp.float32),
        grid_spec=pl.GridSpec(
            grid=grid,
            in_specs=[
                pl.BlockSpec((tb, F), lambda i: (i, 0)),   # activations stream over batch
                pl.BlockSpec((F, C), lambda i: (0, 0)),    # weight: grid-invariant, VMEM-resident
                pl.BlockSpec((1, C), lambda i: (0, 0)),    # bias:   grid-invariant, VMEM-resident
            ],
            out_specs=pl.BlockSpec((tb, C), lambda i: (i, 0)),
        ),
        compiler_params=pltpu.CompilerParams(
            dimension_semantics=("parallel",),   # rows independent -> megacore-shardable (v7x)
            vmem_limit_bytes=vmem_limit,         # v5e's 16 MiB default scoped limit is too small
        ),
        cost_estimate=cost,
    )(x, w_t, b2d)


if __name__ == "__main__":
    key = jax.random.PRNGKey(0)
    k_x1, k_x2, k_x3, k_w, k_b = jax.random.split(key, 5)

    feature_dim = 32
    num_classes = 8

    # Deterministic synthetic parameters (Kaiming-uniform-like bounds, as nn.Linear init).
    bound = 1.0 / (feature_dim ** 0.5)
    weight = jax.random.uniform(k_w, (num_classes, feature_dim),
                                minval=-bound, maxval=bound, dtype=jnp.float32)
    bias = jax.random.uniform(k_b, (num_classes,),
                              minval=-bound, maxval=bound, dtype=jnp.float32)

    def bf16_ref(xv):
        return (jnp.dot(xv.astype(jnp.bfloat16), weight.T.astype(jnp.bfloat16),
                        preferred_element_type=jnp.float32) + bias)

    # 1) Pallas path (forced): auto tile -> 2 grid steps of 32 rows each.
    x1 = jax.random.normal(k_x1, (64, feature_dim), dtype=jnp.float32)
    y1 = jax.block_until_ready(
        expression_classifier_forward(x1, weight, bias, use_pallas=True))
    assert y1.shape == (64, num_classes)
    assert jnp.allclose(y1, bf16_ref(x1), atol=1e-3, rtol=1e-3), "mismatch vs bf16 ref"
    assert jnp.allclose(y1, x1 @ weight.T + bias, atol=5e-2, rtol=5e-2), "mismatch vs f32 ref"

    # 2) Pallas path, uneven batch + explicit tile -> partial last block, no host padding.
    x2 = jax.random.normal(k_x2, (200, feature_dim), dtype=jnp.float32)
    y2 = jax.block_until_ready(
        expression_classifier_forward(x2, weight, bias, tb=64, use_pallas=True))
    assert y2.shape == (200, num_classes)
    assert jnp.allclose(y2, bf16_ref(x2), atol=1e-3, rtol=1e-3), "mismatch on tiled path"

    # 3) Auto path at tiny, module-like shapes -> small-problem bypass (plain XLA matmul).
    x3 = jax.random.normal(k_x3, (8, feature_dim), dtype=jnp.float32)
    y3 = jax.block_until_ready(expression_classifier_forward(x3, weight, bias))
    assert y3.shape == (8, num_classes)
    assert jnp.allclose(y3, bf16_ref(x3), atol=1e-3, rtol=1e-3), "mismatch on bypass path"

    print("KERNEL_OK")
</pallas_src>

<mosaic_0001>
module attributes {stable_mosaic.version = 11 : i64} {
  func.func @_linear_kernel(%arg0: i32, %arg1: memref<32x32xf32, #tpu.memory_space<vmem>>, %arg2: memref<32x8xbf16, #tpu.memory_space<vmem>>, %arg3: memref<1x8xf32, #tpu.memory_space<vmem>>, %arg4: memref<32x8xf32, #tpu.memory_space<vmem>>) attributes {dimension_semantics = [#tpu.dimension_semantics<parallel>], iteration_bounds = array<i64: 2>, scalar_prefetch = 0 : i64, scratch_operands = 0 : i64, tpu.core_type = #tpu.core_type<tc>, window_params = [{transform_indices = @transform_0, window_bounds = array<i64: 32, 32>}, {pipeline_mode = #tpu.pipeline_mode<synchronous>, transform_indices = @transform_1, window_bounds = array<i64: 32, 8>}, {pipeline_mode = #tpu.pipeline_mode<synchronous>, transform_indices = @transform_2, window_bounds = array<i64: 1, 8>}, {transform_indices = @transform_3, window_bounds = array<i64: 32, 8>}]} {
    %c0 = arith.constant 0 : index
    %c0_0 = arith.constant 0 : index
    %0 = vector.load %arg1[%c0, %c0_0] : memref<32x32xf32, #tpu.memory_space<vmem>>, vector<32x32xf32>
    %1 = arith.truncf %0 : vector<32x32xf32> to vector<32x32xbf16>
    %c0_1 = arith.constant 0 : index
    %c0_2 = arith.constant 0 : index
    %2 = vector.load %arg2[%c0_1, %c0_2] : memref<32x8xbf16, #tpu.memory_space<vmem>>, vector<32x8xbf16>
    %cst = arith.constant dense<0.000000e+00> : vector<32x8xf32>
    %3 = tpu.matmul %1, %2, %cst {dimension_numbers = #tpu.dot_dimension_numbers<[1], [0], [0], [1], [0, 0, 1, 1], [], []>} : vector<32x32xbf16>, vector<32x8xbf16>, vector<32x8xf32> -> vector<32x8xf32>
    %c0_3 = arith.constant 0 : index
    %c0_4 = arith.constant 0 : index
    %4 = vector.load %arg3[%c0_3, %c0_4] : memref<1x8xf32, #tpu.memory_space<vmem>>, vector<1x8xf32>
    %5 = vector.broadcast %4 : vector<1x8xf32> to vector<32x8xf32>
    %6 = arith.addf %3, %5 : vector<32x8xf32>
    %c0_5 = arith.constant 0 : index
    %c0_6 = arith.constant 0 : index
    %7 = vector.load %arg4[%c0_5, %c0_6] : memref<32x8xf32, #tpu.memory_space<vmem>>, vector<32x8xf32>
    tpu.vector_store %arg4[%c0_5, %c0_6], %6 {strides = array<i32>} : memref<32x8xf32, #tpu.memory_space<vmem>>, vector<32x8xf32>,
    return
  }
  func.func @transform_0(%arg0: i32) -> (i32, i32) {
    %c0_i32 = arith.constant 0 : i32
    %c0_i32_0 = arith.constant 0 : i32
    return %arg0, %c0_i32 : i32, i32
  }
  func.func @transform_1(%arg0: i32) -> (i32, i32) {
    %c0_i32 = arith.constant 0 : i32
    %c0_i32_0 = arith.constant 0 : i32
    %c0_i32_1 = arith.constant 0 : i32
    return %c0_i32, %c0_i32_0 : i32, i32
  }
  func.func @transform_2(%arg0: i32) -> (i32, i32) {
    %c0_i32 = arith.constant 0 : i32
    %c0_i32_0 = arith.constant 0 : i32
    %c0_i32_1 = arith.constant 0 : i32
    return %c0_i32, %c0_i32_0 : i32, i32
  }
  func.func @transform_3(%arg0: i32) -> (i32, i32) {
    %c0_i32 = arith.constant 0 : i32
    %c0_i32_0 = arith.constant 0 : i32
    return %arg0, %c0_i32 : i32, i32
  }
}

</mosaic_0001>

<llo_original>
// kernel: tpu_custom_call.1
$region0: #{tpu_custom_call.1}
  #allocation0 [shape = 'u32[]', space=smem, size = 0x4, offset = 0x4, fixed_abs, tag = 'smem constant byte address 0x4 - core index']
  #allocation1 [shape = 'u32[144,128]{1,0:T(1,128)}', space=vmem, size = 0x12000, scoped, tag = 'internal scratch']
  %s0 = inlined_call_operand.vmem [shape: f32[64,32], index: 0, kind: input, shape index: {}]
  %s1 = inlined_call_operand.vmem [shape: bf16[32,8], index: 1, kind: input, shape index: {}]
  %s2 = inlined_call_operand.vmem [shape: f32[1,8], index: 2, kind: input, shape index: {}]
  %s3 = inlined_call_operand.vmem [shape: f32[64,8], index: 3, kind: output, shape index: {}]
  %s4 = sld [smem:[#allocation0]]
  $region45: #{tpu_custom_call.1} parent=0
    _
  %s6 = ssub.s32 1, %s4
  %s7 = scalar_select 0, %s6, %s4
  loop: start=0, step=1, limit=4
  $region2: #{tpu_custom_call.1} parent=0 // loop_pre_header
    _
  $region3: #{tpu_custom_call.1} parent=0 // loop_header
    %s9 = sphi 0, %s13
    %p10 = scmp.ge.s32.totalorder %s9, 4
    %s19 = sphi 0, %s21
    %s22 = sphi 0, %s19
    %s23 = sphi 0, %s22
    %s39 = sphi 0, %s23
    %s43 = sphi 0, %s43
    %s45 = sphi 0, %s43
    %s46 = sphi 0, %s45
    %s60 = sphi 0, %s46
    %s64 = sphi 0, %s64
    %s66 = sphi 0, %s64
    %s67 = sphi 0, %s66
    %s81 = sphi 0, %s67
    %s87 = sphi 0, %s89
    %s90 = sphi 0, %s87
    %s91 = sphi 0, %s90
    %s107 = sphi 0, %s91
  $region4: #{tpu_custom_call.1} parent=0 // loop_header_branch
    %12 = sbr.rel (%p10) target = $region8
  $region5: #{tpu_custom_call.1} parent=0 // loop_body
    %s14 = ssub.s32 %s9, 1
    %s15 = ssub.s32 %s9, 2
    %s16 = sadd.s32 %s9, 1
    %s17 = ssub.s32 %s9, %s16
    %p18 = scmp.eq.s32.totalorder %s17, 0
    %s20 = sadd.s32 %s19, 1
    %s21 = scalar_select %p18, %s19, %s20
    %p24 = pneg %p18
    %p25 = scmp.eq.s32.totalorder %s9, 1
    %p26 = por %p24, %p25
    %p27 = scmp.ne.s32.totalorder %s19, %s22
    %p28 = scmp.eq.s32.totalorder %s9, 0
    %p29 = por %p27, %p28
    %p30 = scmp.ne.s32.totalorder %s19, %s22
    %p31 = scmp.eq.s32.totalorder %s14, 1
    %p32 = por %p30, %p31
    %p33 = scmp.ne.s32.totalorder %s22, %s23
    %p34 = scmp.eq.s32.totalorder %s14, 0
    %p35 = por %p33, %p34
    %p36 = scmp.ne.s32.totalorder %s22, %s23
    %p37 = scmp.eq.s32.totalorder %s15, 1
    %p38 = por %p36, %p37
    %p40 = scmp.ne.s32.totalorder %s23, %s39
    %p41 = scmp.eq.s32.totalorder %s15, 0
    %p42 = por %p40, %p41
    %s44 = sadd.s32 %s43, 1
    %p47 = scmp.eq.s32.totalorder %s9, 1
    %p48 = scmp.ne.s32.totalorder %s43, %s45
    %p49 = scmp.eq.s32.totalorder %s9, 0
    %p50 = por %p48, %p49
    %p51 = scmp.ne.s32.totalorder %s43, %s45
    %p52 = scmp.eq.s32.totalorder %s14, 1
    %p53 = por %p51, %p52
    %p54 = scmp.ne.s32.totalorder %s45, %s46
    %p55 = scmp.eq.s32.totalorder %s14, 0
    %p56 = por %p54, %p55
    %p57 = scmp.ne.s32.totalorder %s45, %s46
    %p58 = scmp.eq.s32.totalorder %s15, 1
    %p59 = por %p57, %p58
    %p61 = scmp.ne.s32.totalorder %s46, %s60
    %p62 = scmp.eq.s32.totalorder %s15, 0
    %p63 = por %p61, %p62
    %s65 = sadd.s32 %s64, 1
    %p68 = scmp.eq.s32.totalorder %s9, 1
    %p69 = scmp.ne.s32.totalorder %s64, %s66
    %p70 = scmp.eq.s32.totalorder %s9, 0
    %p71 = por %p69, %p70
    %p72 = scmp.ne.s32.totalorder %s64, %s66
    %p73 = scmp.eq.s32.totalorder %s14, 1
    %p74 = por %p72, %p73
    %p75 = scmp.ne.s32.totalorder %s66, %s67
    %p76 = scmp.eq.s32.totalorder %s14, 0
    %p77 = por %p75, %p76
    %p78 = scmp.ne.s32.totalorder %s66, %s67
    %p79 = scmp.eq.s32.totalorder %s15, 1
    %p80 = por %p78, %p79
    %p82 = scmp.ne.s32.totalorder %s67, %s81
    %p83 = scmp.eq.s32.totalorder %s15, 0
    %p84 = por %p82, %p83
    %s85 = ssub.s32 %s9, %s16
    %p86 = scmp.eq.s32.totalorder %s85, 0
    %s88 = sadd.s32 %s87, 1
    %s89 = scalar_select %p86, %s87, %s88
    %p92 = pneg %p86
    %p93 = scmp.eq.s32.totalorder %s9, 1
    %p94 = por %p92, %p93
    %p95 = scmp.ne.s32.totalorder %s87, %s90
    %p96 = scmp.eq.s32.totalorder %s9, 0
    %p97 = por %p95, %p96
    %p98 = scmp.ne.s32.totalorder %s87, %s90
    %p99 = scmp.eq.s32.totalorder %s14, 1
    %p100 = por %p98, %p99
    %p101 = scmp.ne.s32.totalorder %s90, %s91
    %p102 = scmp.eq.s32.totalorder %s14, 0
    %p103 = por %p101, %p102
    %p104 = scmp.ne.s32.totalorder %s90, %s91
    %p105 = scmp.eq.s32.totalorder %s15, 1
    %p106 = por %p104, %p105
    %p108 = scmp.ne.s32.totalorder %s91, %s107
    %p109 = scmp.eq.s32.totalorder %s15, 0
    %p110 = por %p108, %p109
    %p111 = scmp.le.s32.totalorder 1, %s9
    %p112 = scmp.lt.s32.totalorder %s9, 3
    %p113 = pnand %p111, %p112
    %p114 = pneg %p113
    // Predicated region
    $region9: #{tpu_custom_call.1} parent=5 // pred_check
      _
    $region10: #{tpu_custom_call.1} parent=5 // pred_check_branch
      %116 = sbr.rel (%p113) target = $region12
    $region11: #{tpu_custom_call.1} parent=5 // pred_region
      %s117 = ssub.s32 %s9, 1
      // Predicated region
      $region13: #{tpu_custom_call.1} parent=11 // pred_check
        %p118 = pneg %p56
      $region14: #{tpu_custom_call.1} parent=11 // pred_check_branch
        %120 = sbr.rel (%p118) target = $region16
      $region15: #{tpu_custom_call.1} parent=11 // pred_region
        _
      $region16: #{tpu_custom_call.1} parent=11 // pred_fallthru
        _
      // Predicated region
      $region17: #{tpu_custom_call.1} parent=11 // pred_check
        %p121 = pneg %p77
      $region18: #{tpu_custom_call.1} parent=11 // pred_check_branch
        %123 = sbr.rel (%p121) target = $region20
      $region19: #{tpu_custom_call.1} parent=11 // pred_region
        _
      $region20: #{tpu_custom_call.1} parent=11 // pred_fallthru
        _
    $region12: #{tpu_custom_call.1} parent=5 // pred_fallthru
      _
    %p124 = scmp.lt.s32.totalorder %s9, 2
    // Predicated region
    $region21: #{tpu_custom_call.1} parent=5 // pred_check
      %p125 = pneg %p124
    $region22: #{tpu_custom_call.1} parent=5 // pred_check_branch
      %127 = sbr.rel (%p125) target = $region24
    $region23: #{tpu_custom_call.1} parent=5 // pred_region
      // Predicated region
      $region25: #{tpu_custom_call.1} parent=23 // pred_check
        %p128 = pneg %p29
      $region26: #{tpu_custom_call.1} parent=23 // pred_check_branch
        %130 = sbr.rel (%p128) target = $region28
      $region27: #{tpu_custom_call.1} parent=23 // pred_region
        %s131 = smul.u32 4, %s9
        %p132 = scmp.lt.s32.totalorder %s131, 7
        %s133 = scalar_select %p132, %s131, 7
        %s134 = smul.addr %s133, 8
        %s135 = scalar_lea.vmem %s0, %s134
        %s136 = smul.u32 4, %s9
      $region28: #{tpu_custom_call.1} parent=23 // pred_fallthru
        _
    $region24: #{tpu_custom_call.1} parent=5 // pred_fallthru
      _
    %p137 = scmp.le.s32.totalorder 1, %s9
    %p138 = scmp.lt.s32.totalorder %s9, 3
    %p139 = pnand %p137, %p138
    %p140 = pneg %p139
    // Predicated region
    $region29: #{tpu_custom_call.1} parent=5 // pred_check
      _
    $region30: #{tpu_custom_call.1} parent=5 // pred_check_branch
      %142 = sbr.rel (%p139) target = $region32
    $region31: #{tpu_custom_call.1} parent=5 // pred_region
      %s143 = ssub.s32 %s9, 1
      %s144 = smul.u32 4, %s14
      %p145 = scmp.lt.s32.totalorder %s144, 7
      %s146 = scalar_select %p145, %s144, 7
      %s147 = smul.addr %s146, 8
      %s148 = scalar_lea.vmem %s0, %s147
      %p149 = pneg %p35
      %p150 = pneg %p32
      %p151 = pneg %p56
      %p152 = pneg %p53
      %p153 = pneg %p77
      %p154 = pneg %p74
      %p155 = pneg %p103
      %p156 = pneg %p100
      %s157 = smul.u32 4, %s14
      %p158 = scmp.lt.s32.totalorder %s157, 7
      %s159 = scalar_select %p158, %s157, 7
      %s160 = smul.addr %s159, 8
      %s161 = scalar_lea.vmem %s3, %s160
      %s162 = smul.u32 4, %s14
      %p163 = scmp.lt.s32.totalorder %s162, 7
      %s164 = scalar_select %p163, %s162, 7
      %s165 = smul.addr %s164, 8
      %s166 = scalar_lea.vmem %s0, %s165
      %s167 = smul.u32 4, %s14
      %s168 = smul.u32 4, %s14
      %p169 = scmp.lt.s32.totalorder %s168, 7
      %s170 = scalar_select %p169, %s168, 7
      %s171 = smul.addr %s170, 8
      %s172 = scalar_lea.vmem %s3, %s171
      %s173 = smul.u32 4, %s14
      %v175 = vld [vmem:[%s166] sm:$0xff]
      %v176 = vld [vmem:[%s166 + $0x8] sm:$0xff]
      %v177 = vld [vmem:[%s166 + $0x10] sm:$0xff]
      %v178 = vld [vmem:[%s166 + $0x18] sm:$0xff]
      %v179 = vpack.c.bf16 %v176, %v175
      %v180 = vpack.c.bf16 %v178, %v177
      %v181 = vld [vmem:[%s1] sm:$0xf]
      %v182 = vld [vmem:[%s1 + $0x4] sm:$0xf]
      %v183 = vld [vmem:[%s1 + $0x8] sm:$0xf]
      %v184 = vld [vmem:[%s1 + $0xc] sm:$0xf]
      %v185 = vld [vmem:[%s2] sm:$0x1]
      %v187 = vlaneseq
      %v188 = vshrl.u32 %v187, 7
      %v189 = vsub.s32 0, %v188
      %v190 = vrot.slane %v185, %v189
      %v196 = vunpack.c.l.b16 %v181
      %v197 = vunpack.c.l.b16 %v182
      %v198 = vunpack.c.l.b16 %v183
      %v199 = vunpack.c.l.b16 %v184
      %v200 = vpack.c.b16 %v197, %v196
      %v201 = vpack.c.b16 %v199, %v198
      %vm204 = vcmask 261120
      %v206 = vsel %vm204, %v179, 0
      %v209 = vsel %vm204, %v180, 0
      %211 = vmatprep.subr.bf16.mxu0 0
      %212 = vmatpush1.bf16.msra.mxu0 %v200
      %213 = vmatprep.subr.bf16.mxu0 0
      %214 = vmatpush1.bf16.msra.mxu0 %v201
      %215 = vmatprep.subr.bf16.mxu0 0
      %216 = vmatpush1.bf16.msra.mxu0 0
      %217 = vmatprep.subr.bf16.mxu0 0
      %218 = vmatpush1.bf16.msra.mxu0 0
      %219 = vmatprep.subr.bf16.mxu0 0
      %220 = vmatpush1.bf16.msra.mxu0 0
      %221 = vmatprep.subr.bf16.mxu0 0
      %222 = vmatpush1.bf16.msra.mxu0 0
      %223 = vmatprep.subr.bf16.mxu0 0
      %224 = vmatpush1.bf16.msra.mxu0 0
      %225 = vmatprep.subr.bf16.mxu0 0
      %226 = vmatpush1.bf16.msra.mxu0 0
      %227 = vmatprep.subr.bf16.mxu0 0
      %228 = vmatpush1.bf16.msra.mxu0 0
      %229 = vmatprep.subr.bf16.mxu0 0
      %230 = vmatpush1.bf16.msra.mxu0 0
      %231 = vmatprep.subr.bf16.mxu0 0
      %232 = vmatpush1.bf16.msra.mxu0 0
      %233 = vmatprep.subr.bf16.mxu0 0
      %234 = vmatpush1.bf16.msra.mxu0 0
      %235 = vmatprep.subr.bf16.mxu0 0
      %236 = vmatpush1.bf16.msra.mxu0 0
      %237 = vmatprep.subr.bf16.mxu0 0
      %238 = vmatpush1.bf16.msra.mxu0 0
      %239 = vmatprep.subr.bf16.mxu0 0
      %240 = vmatpush1.bf16.msra.mxu0 0
      %241 = vmatprep.subr.bf16.mxu0 0
      %242 = vmatpush1.bf16.msra.mxu0 0
      %243 = vmatprep.mubr.bf16.mxu0 0
      %244 = vmatmul.mubr.bf16.gmra.mrb[0].mxu0 %v206
      %v245 = vpop.f32.mrb[0].mxu0
      %v246 = vadd.f32 %v190, %v245
      %v247 = vpop.f32.mrb[0].mxu0
      %v248 = vpop.f32.mrb[0].mxu0
      %v249 = vadd.f32 %v190, %v248
      %v250 = vpop.f32.mrb[0].mxu0
      %251 = vmatprep.mubr.bf16.mxu0 0
      %252 = vmatmul.mubr.bf16.gmra.mrb[0].mxu0 %v209
      %v253 = vpop.f32.mrb[0].mxu0
      %v254 = vadd.f32 %v190, %v253
      %v255 = vpop.f32.mrb[0].mxu0
      %v256 = vpop.f32.mrb[0].mxu0
      %v257 = vadd.f32 %v190, %v256
      %v258 = vpop.f32.mrb[0].mxu0
      %259 = vdwg.mxu0
      %vm260 = vcmask 64512
      %261 = vst.msk [vmem:[%s172] sm:$0xff] %vm260, %v246
      %262 = vst.msk [vmem:[%s172 + $0x8] sm:$0xff] %vm260, %v249
      %263 = vst.msk [vmem:[%s172 + $0x10] sm:$0xff] %vm260, %v254
      %264 = vst.msk [vmem:[%s172 + $0x18] sm:$0xff] %vm260, %v257
      %s265 = smul.u32 4, %s14
      %p266 = scmp.lt.s32.totalorder %s265, 7
      %s267 = scalar_select %p266, %s265, 7
      %s268 = smul.addr %s267, 8
      %s269 = scalar_lea.vmem %s3, %s268
      // Predicated region
      $region33: #{tpu_custom_call.1} parent=31 // pred_check
        %p270 = pneg %p100
      $region34: #{tpu_custom_call.1} parent=31 // pred_check_branch
        %272 = sbr.rel (%p270) target = $region36
      $region35: #{tpu_custom_call.1} parent=31 // pred_region
        %s273 = smul.u32 4, %s14
      $region36: #{tpu_custom_call.1} parent=31 // pred_fallthru
        _
    $region32: #{tpu_custom_call.1} parent=5 // pred_fallthru
      _
    %p274 = scmp.le.s32.totalorder 2, %s9
    // Predicated region
    $region37: #{tpu_custom_call.1} parent=5 // pred_check
      %p275 = pneg %p274
    $region38: #{tpu_custom_call.1} parent=5 // pred_check_branch
      %277 = sbr.rel (%p275) target = $region40
    $region39: #{tpu_custom_call.1} parent=5 // pred_region
      %s278 = ssub.s32 %s9, 2
      // Predicated region
      $region41: #{tpu_custom_call.1} parent=39 // pred_check
        %p279 = pneg %p106
      $region42: #{tpu_custom_call.1} parent=39 // pred_check_branch
        %281 = sbr.rel (%p279) target = $region44
      $region43: #{tpu_custom_call.1} parent=39 // pred_region
        %s282 = smul.u32 4, %s15
        %p283 = scmp.lt.s32.totalorder %s282, 7
        %s284 = scalar_select %p283, %s282, 7
        %s285 = smul.addr %s284, 8
        %s286 = scalar_lea.vmem %s3, %s285
      $region44: #{tpu_custom_call.1} parent=39 // pred_fallthru
        _
    $region40: #{tpu_custom_call.1} parent=5 // pred_fallthru
      _
  $region6: #{tpu_custom_call.1} parent=0 // loop_footer
    %s13 = sadd.s32 1, %s9
  $region7: #{tpu_custom_call.1} parent=0 // loop_footer_branch
    %8 = sbr.rel target = $region3
  $region8: #{tpu_custom_call.1} parent=0 // loop_exit
    _

</llo_original>
